<compile_context>
chip_gen: v7x
topology: tpu7x:2x2x1
jax: 0.10.0
libtpu: 0.0.40
codegen_flags: <defaults>
</compile_context>

<pallas_src>
import jax
import jax.numpy as jnp
from jax import lax
from jax.experimental import pallas as pl
from jax.experimental.pallas import tpu as pltpu

METRIC_NAMES = (
    "loss/policy",
    "loss/weighted-policy",
    "loss/value",
    "loss/weighted-value",
    "loss/entropy",
    "loss/weighted-entropy",
    "loss/clipped-entropy",
    "loss/total",
    "metrics/policy-approx-kl",
    "metrics/policy-clip-frac",
    "metrics/value-clip-frac",
    "metrics/entropy",
)

# Row layout of the packed [7, B_pad/128, 128] input.
_ROW_LP, _ROW_OLP, _ROW_ENT, _ROW_ADV, _ROW_VT, _ROW_V, _ROW_OV = range(7)

_LANE_TILE = 8 * 128  # pad batch to a whole (8, 128) vreg so every tile is dense


def _huber(d):
    # nn.HuberLoss(reduction='none', delta=1.0) applied to a precomputed diff.
    a = jnp.abs(d)
    return jnp.where(a < 1.0, 0.5 * d * d, a - 0.5)


def _make_ppo_loss_kernel(n_true: int, n_pad: int):
    """Builds the kernel with the static true/padded batch sizes baked in."""
    f32 = jnp.float32
    r = n_pad // 128
    shape = (r, 128)
    inv_n = 1.0 / float(n_true)
    inv_nm1 = 1.0 / float(max(n_true - 1, 1))   # torch unbiased var (guard n==1)
    needs_mask = n_true != n_pad

    def kernel(hp_ref, x_ref, out_ref):
        # hp_ref : SMEM f32[5] -> [ppo_clip_ac, ppo_clip_vf, value_weight,
        #                          entropy_weight, entropy_clip]
        # x_ref  : VMEM f32[7, R, 128] sublane+lane-dense per-sample rows
        # out_ref: SMEM f32[12] metrics
        ppo_clip_ac = hp_ref[0]
        ppo_clip_vf = hp_ref[1]
        value_weight = hp_ref[2]
        entropy_weight = hp_ref[3]
        entropy_clip = hp_ref[4]

        lp = x_ref[_ROW_LP]        # [R, 128] fully dense (no sublane extraction)
        olp = x_ref[_ROW_OLP]
        ent = x_ref[_ROW_ENT]
        adv = x_ref[_ROW_ADV]
        vt = x_ref[_ROW_VT]
        values = x_ref[_ROW_V]
        ov = x_ref[_ROW_OV]

        if needs_mask:
            lin = (lax.broadcasted_iota(jnp.int32, shape, 0) * 128
                   + lax.broadcasted_iota(jnp.int32, shape, 1))
            mask = (lin < n_true).astype(f32)
        else:
            mask = None

        # Hoisted hyperparameter broadcasts, reused below.
        ca_b = jnp.full(shape, ppo_clip_ac, f32)
        cv_b = jnp.full(shape, ppo_clip_vf, f32)

        # ---- Pass 1: dense elementwise rows + dense reductions --------------
        # Zero-padded lanes are neutral for every sum below except the entropy
        # penalty, which is masked explicitly.
        logr = lp - olp
        ratio = jnp.exp(logr)
        rm1 = ratio - 1.0
        clipped_ratio = jnp.clip(ratio, 1.0 - ca_b, 1.0 + ca_b)

        dv = values - ov
        clipped_values = ov + jnp.clip(dv, -cv_b, cv_b)   # == clamp(v, ov-c, ov+c)
        vloss = jnp.maximum(_huber(values - vt), _huber(clipped_values - vt))

        ent_pen = jnp.maximum(entropy_clip - ent, 0.0)
        if needs_mask:
            ent_pen = ent_pen * mask
        kl = rm1 - logr                                   # exp(logr) - 1 - logr
        pclip = (jnp.abs(rm1) > ca_b).astype(f32)
        vclip = (jnp.abs(dv) > cv_b).astype(f32)

        sum_adv = jnp.sum(adv)
        sum_vloss = jnp.sum(vloss)
        sum_ent = jnp.sum(ent)
        sum_pen = jnp.sum(ent_pen)
        sum_kl = jnp.sum(kl)
        sum_pclip = jnp.sum(pclip)
        sum_vclip = jnp.sum(vclip)

        # ---- Pass 2: advantage normalization + clipped surrogate ------------
        mean_adv = sum_adv * inv_n
        centered = adv - mean_adv
        if needs_mask:
            centered = centered * mask
        var_adv = jnp.sum(centered * centered) * inv_nm1   # torch unbiased var
        adv_n = centered * lax.rsqrt(var_adv + 1e-8) + mean_adv
        surr = jnp.minimum(ratio * adv_n, clipped_ratio * adv_n)
        if needs_mask:
            surr = surr * mask        # min(a*m, b*m) == min(a, b)*m for m >= 0
        sum_surr = jnp.sum(surr)

        policy_loss = -(sum_surr * inv_n)
        value_loss = sum_vloss * inv_n
        entropy_mean = sum_ent * inv_n
        entropy_loss = -entropy_mean
        entropy_penalty = sum_pen * inv_n
        weighted_value = value_weight * value_loss
        weighted_entropy = entropy_weight * entropy_loss
        total = policy_loss + weighted_entropy + entropy_penalty + weighted_value

        out_ref[0] = policy_loss
        out_ref[1] = policy_loss          # loss/weighted-policy == loss/policy
        out_ref[2] = value_loss
        out_ref[3] = weighted_value
        out_ref[4] = entropy_loss
        out_ref[5] = weighted_entropy
        out_ref[6] = entropy_penalty
        out_ref[7] = total
        out_ref[8] = sum_kl * inv_n
        out_ref[9] = sum_pclip * inv_n
        out_ref[10] = sum_vclip * inv_n
        out_ref[11] = entropy_mean

    return kernel


def ppo_loss_pallas(
    logprobs,
    old_logprobs,
    entropies,
    advantages,
    value_targets,
    values,
    old_values,
    *,
    value_weight,
    entropy_weight,
    entropy_clip,
    ppo_clip_ac,
    ppo_clip_vf,
):
    f32 = jnp.float32
    b = logprobs.shape[0]

    # Fold the sum-over-actions into the XLA producers: the kernel only needs
    # the [B] row-sums, so the [B, A] tensors never cross the custom-call DMA.
    lp = jnp.sum(jnp.asarray(logprobs, f32), axis=1)
    olp = jnp.sum(jnp.asarray(old_logprobs, f32), axis=1)
    ent = jnp.sum(jnp.asarray(entropies, f32), axis=1)

    packed = jnp.stack(
        [
            lp,
            olp,
            ent,
            jnp.asarray(advantages, f32).reshape(b),
            jnp.asarray(value_targets, f32).reshape(b),
            jnp.asarray(values, f32).reshape(b),
            jnp.asarray(old_values, f32).reshape(b),
        ],
        axis=0,
    )  # [7, B] — no explicit zero padding row (sublane 8 is hardware padding)

    # Pad the batch to a multiple of 8*128 so each row reshapes to a fully
    # dense [B_pad/128, 128] tile. Zero padding + in-kernel mask keep every
    # metric exact (all means divide by the true batch size).
    b_pad = ((b + _LANE_TILE - 1) // _LANE_TILE) * _LANE_TILE
    if b_pad != b:
        packed = jnp.pad(packed, ((0, 0), (0, b_pad - b)))
    packed = packed.reshape(7, b_pad // 128, 128)

    # Runtime hyperparameters in SMEM (annealed clip/entropy schedules never
    # force a Mosaic recompile).
    hp = jnp.asarray(
        [ppo_clip_ac, ppo_clip_vf, value_weight, entropy_weight, entropy_clip], f32
    )

    cost = pl.CostEstimate(
        flops=int(40 * b_pad),
        transcendentals=int(b_pad),
        bytes_accessed=int(packed.size * 4 + hp.size * 4 + len(METRIC_NAMES) * 4),
    )

    # 28 bytes / sample: keep the whole thing resident (no grid). Explicit
    # scoped-VMEM limit so large B also fits under v5e's 16 MiB default, capped
    # below v7x's 64 MiB physical VMEM.
    vmem_limit = int(min(max(4 * packed.size * 4, 8 << 20), 48 << 20))

    out = pl.pallas_call(
        _make_ppo_loss_kernel(b, b_pad),
        out_shape=jax.ShapeDtypeStruct((len(METRIC_NAMES),), f32),
        in_specs=[
            pl.BlockSpec(memory_space=pltpu.MemorySpace.SMEM),   # hyperparameters
            pl.BlockSpec(memory_space=pltpu.MemorySpace.VMEM),   # packed [7, R, 128]
        ],
        out_specs=pl.BlockSpec(memory_space=pltpu.MemorySpace.SMEM),
        cost_estimate=cost,
        compiler_params=pltpu.CompilerParams(vmem_limit_bytes=vmem_limit),
    )(hp, packed)
    return {name: out[i] for i, name in enumerate(METRIC_NAMES)}


def _ppo_loss_reference(
    logprobs, old_logprobs, entropies, advantages, value_targets, values,
    old_values, *, value_weight, entropy_weight, entropy_clip, ppo_clip_ac,
    ppo_clip_vf,
):
    """Pure-JAX reference of the PyTorch forward (for the runtime self-check)."""
    f32 = jnp.float32
    lp = jnp.sum(jnp.asarray(logprobs, f32), axis=1)
    olp = jnp.sum(jnp.asarray(old_logprobs, f32), axis=1)
    ent = jnp.sum(jnp.asarray(entropies, f32), axis=1)
    adv = jnp.asarray(advantages, f32)
    vt = jnp.asarray(value_targets, f32)
    v = jnp.asarray(values, f32)
    ov = jnp.asarray(old_values, f32)

    mean = jnp.mean(adv)
    var = jnp.sum((adv - mean) ** 2) / max(adv.shape[0] - 1, 1)
    adv_n = (adv - mean) * lax.rsqrt(var + 1e-8) + mean
    logr = lp - olp
    ratio = jnp.exp(logr)
    clipped = jnp.clip(ratio, 1.0 - ppo_clip_ac, 1.0 + ppo_clip_ac)
    policy_loss = -jnp.mean(jnp.minimum(ratio * adv_n, clipped * adv_n))
    clipped_v = jnp.clip(v, ov - ppo_clip_vf, ov + ppo_clip_vf)
    value_loss = jnp.mean(jnp.maximum(_huber(v - vt), _huber(clipped_v - vt)))
    entropy_mean = jnp.mean(ent)
    entropy_loss = -entropy_mean
    entropy_penalty = jnp.mean(jnp.maximum(entropy_clip - ent, 0.0))
    total = (policy_loss + entropy_weight * entropy_loss + entropy_penalty
             + value_weight * value_loss)
    return {
        "loss/policy": policy_loss,
        "loss/weighted-policy": policy_loss,
        "loss/value": value_loss,
        "loss/weighted-value": value_weight * value_loss,
        "loss/entropy": entropy_loss,
        "loss/weighted-entropy": entropy_weight * entropy_loss,
        "loss/clipped-entropy": entropy_penalty,
        "loss/total": total,
        "metrics/policy-approx-kl": jnp.mean(ratio - 1.0 - logr),
        "metrics/policy-clip-frac": jnp.mean((jnp.abs(ratio - 1.0) > ppo_clip_ac).astype(f32)),
        "metrics/value-clip-frac": jnp.mean((jnp.abs(v - ov) > ppo_clip_vf).astype(f32)),
        "metrics/entropy": entropy_mean,
    }


class PPOLoss:
    """JAX/Pallas port of the PyTorch PPOLoss module's forward pass."""

    def __init__(self, value_weight, entropy_weight, entropy_clip, gamma,
                 gae_lambda, ppo_clip_ac, ppo_clip_vf):
        assert entropy_clip >= 0
        self.value_weight = value_weight
        self.entropy_weight = entropy_weight
        self.entropy_clip = entropy_clip
        self.gamma = gamma
        self.gae_lambda = gae_lambda
        self.ppo_clip_ac = ppo_clip_ac
        self.ppo_clip_vf = ppo_clip_vf

    def advantages(self, traces):
        # TODO(synk): GAE (vec_generalized_advantage_estimate) is not part of forward(); not implemented here.
        raise NotImplementedError

    def forward(self, batch, policy, critic):
        _, logprobs, entropies = policy(batch["states"], None, batch["actions"])
        values = critic(batch["states"])
        return ppo_loss_pallas(
            logprobs,
            batch["log-probs"],
            entropies,
            batch["advantages"],
            batch["value-targets"],
            values,
            batch["values"],
            value_weight=self.value_weight,
            entropy_weight=self.entropy_weight,
            entropy_clip=self.entropy_clip,
            ppo_clip_ac=self.ppo_clip_ac,
            ppo_clip_vf=self.ppo_clip_vf,
        )


if __name__ == "__main__":
    key = jax.random.PRNGKey(0)
    B, N_SIDES, H, W = 8, 4, 4, 4          # states: [batch, N_SIDES, board_h, board_w]
    n_actions, n_classes = 4, 6
    feat = N_SIDES * H * W

    ks = jax.random.split(key, 9)

    # Deterministic stand-in policy / critic parameters (plain-JAX glue).
    w_policy = jax.random.normal(ks[0], (feat, n_actions * n_classes), jnp.float32) * 0.05
    w_critic = jax.random.normal(ks[1], (feat, 1), jnp.float32) * 0.05

    def policy(states, _sampled, actions):
        flat = states.reshape(states.shape[0], -1)
        logits = (flat @ w_policy).reshape(-1, n_actions, n_classes)
        logp = jax.nn.log_softmax(logits, axis=-1)
        act_lp = jnp.take_along_axis(logp, actions[..., None], axis=-1)[..., 0]   # [B, n_actions]
        ent = -jnp.sum(jnp.exp(logp) * logp, axis=-1)                             # [B, n_actions]
        return actions, act_lp, ent

    def critic(states):
        flat = states.reshape(states.shape[0], -1)
        return (flat @ w_critic)[:, 0]                                            # [B]

    states = jax.random.normal(ks[2], (B, N_SIDES, H, W), jnp.float32)
    actions = jax.random.randint(ks[3], (B, n_actions), 0, n_classes)
    old_log_probs = jax.random.uniform(ks[4], (B, n_actions), minval=-2.5, maxval=-0.5)
    advantages = jax.random.normal(ks[5], (B,), jnp.float32)
    value_targets = jax.random.normal(ks[6], (B,), jnp.float32)
    old_values = jax.random.normal(ks[7], (B,), jnp.float32) * 0.1

    batch = {
        "states": states,
        "actions": actions,
        "log-probs": old_log_probs,
        "advantages": advantages,
        "value-targets": value_targets,
        "values": old_values,
    }

    loss_fn = PPOLoss(
        value_weight=0.5,
        entropy_weight=0.01,
        entropy_clip=0.05,
        gamma=0.99,
        gae_lambda=0.95,
        ppo_clip_ac=0.2,
        ppo_clip_vf=0.2,
    )

    metrics = loss_fn.forward(batch, policy, critic)
    jax.block_until_ready(metrics)

    # Runtime self-check against a pure-JAX reference of the PyTorch forward.
    _, lp_ba, ent_ba = policy(states, None, actions)
    vals = critic(states)
    ref = _ppo_loss_reference(
        lp_ba, old_log_probs, ent_ba, advantages, value_targets, vals, old_values,
        value_weight=0.5, entropy_weight=0.01, entropy_clip=0.05,
        ppo_clip_ac=0.2, ppo_clip_vf=0.2,
    )
    for name in METRIC_NAMES:
        got = float(metrics[name])
        want = float(ref[name])
        assert abs(got - want) <= 2e-4 + 2e-3 * abs(want), (name, got, want)

    print("KERNEL_OK")
</pallas_src>

<mosaic_0001>
module attributes {stable_mosaic.version = 11 : i64} {
  func.func @kernel(%arg0: memref<5xf32, #tpu.memory_space<smem>>, %arg1: memref<7x8x128xf32, #tpu.memory_space<vmem>>, %arg2: memref<12xf32, #tpu.memory_space<smem>>) attributes {dimension_semantics = [], scalar_prefetch = 0 : i64, scratch_operands = 0 : i64, tpu.core_type = #tpu.core_type<tc>} {
    %c0 = arith.constant 0 : index
    %0 = memref.load %arg0[%c0] : memref<5xf32, #tpu.memory_space<smem>>
    %c1 = arith.constant 1 : index
    %1 = memref.load %arg0[%c1] : memref<5xf32, #tpu.memory_space<smem>>
    %c2 = arith.constant 2 : index
    %2 = memref.load %arg0[%c2] : memref<5xf32, #tpu.memory_space<smem>>
    %c3 = arith.constant 3 : index
    %3 = memref.load %arg0[%c3] : memref<5xf32, #tpu.memory_space<smem>>
    %c4 = arith.constant 4 : index
    %4 = memref.load %arg0[%c4] : memref<5xf32, #tpu.memory_space<smem>>
    %c0_0 = arith.constant 0 : index
    %c0_1 = arith.constant 0 : index
    %c0_2 = arith.constant 0 : index
    %5 = vector.load %arg1[%c0_0, %c0_1, %c0_2] : memref<7x8x128xf32, #tpu.memory_space<vmem>>, vector<1x8x128xf32>
    %6 = vector.shape_cast %5 : vector<1x8x128xf32> to vector<8x128xf32>
    %c1_3 = arith.constant 1 : index
    %c0_4 = arith.constant 0 : index
    %c0_5 = arith.constant 0 : index
    %7 = vector.load %arg1[%c1_3, %c0_4, %c0_5] : memref<7x8x128xf32, #tpu.memory_space<vmem>>, vector<1x8x128xf32>
    %8 = vector.shape_cast %7 : vector<1x8x128xf32> to vector<8x128xf32>
    %c2_6 = arith.constant 2 : index
    %c0_7 = arith.constant 0 : index
    %c0_8 = arith.constant 0 : index
    %9 = vector.load %arg1[%c2_6, %c0_7, %c0_8] : memref<7x8x128xf32, #tpu.memory_space<vmem>>, vector<1x8x128xf32>
    %10 = vector.shape_cast %9 : vector<1x8x128xf32> to vector<8x128xf32>
    %c3_9 = arith.constant 3 : index
    %c0_10 = arith.constant 0 : index
    %c0_11 = arith.constant 0 : index
    %11 = vector.load %arg1[%c3_9, %c0_10, %c0_11] : memref<7x8x128xf32, #tpu.memory_space<vmem>>, vector<1x8x128xf32>
    %12 = vector.shape_cast %11 : vector<1x8x128xf32> to vector<8x128xf32>
    %c4_12 = arith.constant 4 : index
    %c0_13 = arith.constant 0 : index
    %c0_14 = arith.constant 0 : index
    %13 = vector.load %arg1[%c4_12, %c0_13, %c0_14] : memref<7x8x128xf32, #tpu.memory_space<vmem>>, vector<1x8x128xf32>
    %14 = vector.shape_cast %13 : vector<1x8x128xf32> to vector<8x128xf32>
    %c5 = arith.constant 5 : index
    %c0_15 = arith.constant 0 : index
    %c0_16 = arith.constant 0 : index
    %15 = vector.load %arg1[%c5, %c0_15, %c0_16] : memref<7x8x128xf32, #tpu.memory_space<vmem>>, vector<1x8x128xf32>
    %16 = vector.shape_cast %15 : vector<1x8x128xf32> to vector<8x128xf32>
    %c6 = arith.constant 6 : index
    %c0_17 = arith.constant 0 : index
    %c0_18 = arith.constant 0 : index
    %17 = vector.load %arg1[%c6, %c0_17, %c0_18] : memref<7x8x128xf32, #tpu.memory_space<vmem>>, vector<1x8x128xf32>
    %18 = vector.shape_cast %17 : vector<1x8x128xf32> to vector<8x128xf32>
    %19 = tpu.iota {dimensions = array<i32: 0>} : vector<8x128xi32>
    %c128_i32 = arith.constant 128 : i32
    %20 = vector.broadcast %c128_i32 : i32 to vector<8x128xi32>
    %21 = arith.muli %19, %20 : vector<8x128xi32>
    %22 = tpu.iota {dimensions = array<i32: 1>} : vector<8x128xi32>
    %23 = arith.addi %21, %22 : vector<8x128xi32>
    %c8_i32 = arith.constant 8 : i32
    %24 = vector.broadcast %c8_i32 : i32 to vector<8x128xi32>
    %25 = arith.cmpi slt, %23, %24 : vector<8x128xi32>
    %26 = arith.extui %25 : vector<8x128xi1> to vector<8x128xi32>
    %27 = arith.sitofp %26 : vector<8x128xi32> to vector<8x128xf32>
    %28 = vector.broadcast %0 : f32 to vector<8x128xf32>
    %29 = vector.broadcast %1 : f32 to vector<8x128xf32>
    %30 = arith.subf %6, %8 : vector<8x128xf32>
    %31 = math.exp %30 : vector<8x128xf32>
    %cst = arith.constant 1.000000e+00 : f32
    %32 = vector.broadcast %cst : f32 to vector<8x128xf32>
    %33 = arith.subf %31, %32 : vector<8x128xf32>
    %cst_19 = arith.constant 1.000000e+00 : f32
    %34 = vector.broadcast %cst_19 : f32 to vector<8x128xf32>
    %35 = arith.subf %34, %28 : vector<8x128xf32>
    %cst_20 = arith.constant 1.000000e+00 : f32
    %36 = vector.broadcast %cst_20 : f32 to vector<8x128xf32>
    %37 = arith.addf %36, %28 : vector<8x128xf32>
    %38 = arith.maximumf %35, %31 : vector<8x128xf32>
    %39 = arith.minimumf %37, %38 : vector<8x128xf32>
    %40 = arith.subf %16, %18 : vector<8x128xf32>
    %cst_21 = arith.constant 0.000000e+00 : f32
    %41 = vector.broadcast %cst_21 : f32 to vector<8x128xf32>
    %42 = arith.subf %41, %29 : vector<8x128xf32>
    %43 = arith.maximumf %42, %40 : vector<8x128xf32>
    %44 = arith.minimumf %29, %43 : vector<8x128xf32>
    %45 = arith.addf %18, %44 : vector<8x128xf32>
    %46 = arith.subf %16, %14 : vector<8x128xf32>
    %47 = math.absf %46 : vector<8x128xf32>
    %cst_22 = arith.constant 1.000000e+00 : f32
    %48 = vector.broadcast %cst_22 : f32 to vector<8x128xf32>
    %49 = arith.cmpf olt, %47, %48 : vector<8x128xf32>
    %cst_23 = arith.constant 5.000000e-01 : f32
    %50 = vector.broadcast %cst_23 : f32 to vector<8x128xf32>
    %51 = arith.mulf %50, %46 : vector<8x128xf32>
    %52 = arith.mulf %51, %46 : vector<8x128xf32>
    %cst_24 = arith.constant 5.000000e-01 : f32
    %53 = vector.broadcast %cst_24 : f32 to vector<8x128xf32>
    %54 = arith.subf %47, %53 : vector<8x128xf32>
    %55 = arith.select %49, %52, %54 : vector<8x128xi1>, vector<8x128xf32>
    %56 = arith.subf %45, %14 : vector<8x128xf32>
    %57 = math.absf %56 : vector<8x128xf32>
    %cst_25 = arith.constant 1.000000e+00 : f32
    %58 = vector.broadcast %cst_25 : f32 to vector<8x128xf32>
    %59 = arith.cmpf olt, %57, %58 : vector<8x128xf32>
    %cst_26 = arith.constant 5.000000e-01 : f32
    %60 = vector.broadcast %cst_26 : f32 to vector<8x128xf32>
    %61 = arith.mulf %60, %56 : vector<8x128xf32>
    %62 = arith.mulf %61, %56 : vector<8x128xf32>
    %cst_27 = arith.constant 5.000000e-01 : f32
    %63 = vector.broadcast %cst_27 : f32 to vector<8x128xf32>
    %64 = arith.subf %57, %63 : vector<8x128xf32>
    %65 = arith.select %59, %62, %64 : vector<8x128xi1>, vector<8x128xf32>
    %66 = arith.maximumf %55, %65 : vector<8x128xf32>
    %67 = vector.broadcast %4 : f32 to vector<8x128xf32>
    %68 = arith.subf %67, %10 : vector<8x128xf32>
    %cst_28 = arith.constant 0.000000e+00 : f32
    %69 = vector.broadcast %cst_28 : f32 to vector<8x128xf32>
    %70 = arith.maximumf %68, %69 : vector<8x128xf32>
    %71 = arith.mulf %70, %27 : vector<8x128xf32>
    %72 = arith.subf %33, %30 : vector<8x128xf32>
    %73 = math.absf %33 : vector<8x128xf32>
    %74 = arith.cmpf ogt, %73, %28 : vector<8x128xf32>
    %75 = arith.extui %74 : vector<8x128xi1> to vector<8x128xi32>
    %76 = arith.sitofp %75 : vector<8x128xi32> to vector<8x128xf32>
    %77 = math.absf %40 : vector<8x128xf32>
    %78 = arith.cmpf ogt, %77, %29 : vector<8x128xf32>
    %79 = arith.extui %78 : vector<8x128xi1> to vector<8x128xi32>
    %80 = arith.sitofp %79 : vector<8x128xi32> to vector<8x128xf32>
    %81 = vector.shape_cast %12 : vector<8x128xf32> to vector<1x8x128xf32>
    %cst_29 = arith.constant dense<0.000000e+00> : vector<1xf32>
    %82 = vector.multi_reduction <add>, %81, %cst_29 [1, 2] : vector<1x8x128xf32> to vector<1xf32>
    %83 = vector.shape_cast %82 : vector<1xf32> to vector<1x1x1xf32>
    %84 = vector.extract %83[0, 0, 0] : f32 from vector<1x1x1xf32>
    %85 = vector.shape_cast %66 : vector<8x128xf32> to vector<1x8x128xf32>
    %cst_30 = arith.constant dense<0.000000e+00> : vector<1xf32>
    %86 = vector.multi_reduction <add>, %85, %cst_30 [1, 2] : vector<1x8x128xf32> to vector<1xf32>
    %87 = vector.shape_cast %86 : vector<1xf32> to vector<1x1x1xf32>
    %88 = vector.extract %87[0, 0, 0] : f32 from vector<1x1x1xf32>
    %89 = vector.shape_cast %10 : vector<8x128xf32> to vector<1x8x128xf32>
    %cst_31 = arith.constant dense<0.000000e+00> : vector<1xf32>
    %90 = vector.multi_reduction <add>, %89, %cst_31 [1, 2] : vector<1x8x128xf32> to vector<1xf32>
    %91 = vector.shape_cast %90 : vector<1xf32> to vector<1x1x1xf32>
    %92 = vector.extract %91[0, 0, 0] : f32 from vector<1x1x1xf32>
    %93 = vector.shape_cast %71 : vector<8x128xf32> to vector<1x8x128xf32>
    %cst_32 = arith.constant dense<0.000000e+00> : vector<1xf32>
    %94 = vector.multi_reduction <add>, %93, %cst_32 [1, 2] : vector<1x8x128xf32> to vector<1xf32>
    %95 = vector.shape_cast %94 : vector<1xf32> to vector<1x1x1xf32>
    %96 = vector.extract %95[0, 0, 0] : f32 from vector<1x1x1xf32>
    %97 = vector.shape_cast %72 : vector<8x128xf32> to vector<1x8x128xf32>
    %cst_33 = arith.constant dense<0.000000e+00> : vector<1xf32>
    %98 = vector.multi_reduction <add>, %97, %cst_33 [1, 2] : vector<1x8x128xf32> to vector<1xf32>
    %99 = vector.shape_cast %98 : vector<1xf32> to vector<1x1x1xf32>
    %100 = vector.extract %99[0, 0, 0] : f32 from vector<1x1x1xf32>
    %101 = vector.shape_cast %76 : vector<8x128xf32> to vector<1x8x128xf32>
    %cst_34 = arith.constant dense<0.000000e+00> : vector<1xf32>
    %102 = vector.multi_reduction <add>, %101, %cst_34 [1, 2] : vector<1x8x128xf32> to vector<1xf32>
    %103 = vector.shape_cast %102 : vector<1xf32> to vector<1x1x1xf32>
    %104 = vector.extract %103[0, 0, 0] : f32 from vector<1x1x1xf32>
    %105 = vector.shape_cast %80 : vector<8x128xf32> to vector<1x8x128xf32>
    %cst_35 = arith.constant dense<0.000000e+00> : vector<1xf32>
    %106 = vector.multi_reduction <add>, %105, %cst_35 [1, 2] : vector<1x8x128xf32> to vector<1xf32>
    %107 = vector.shape_cast %106 : vector<1xf32> to vector<1x1x1xf32>
    %108 = vector.extract %107[0, 0, 0] : f32 from vector<1x1x1xf32>
    %cst_36 = arith.constant 1.250000e-01 : f32
    %109 = arith.mulf %84, %cst_36 : f32
    %110 = vector.broadcast %109 : f32 to vector<8x128xf32>
    %111 = arith.subf %12, %110 : vector<8x128xf32>
    %112 = arith.mulf %111, %27 : vector<8x128xf32>
    %113 = arith.mulf %112, %112 : vector<8x128xf32>
    %114 = vector.shape_cast %113 : vector<8x128xf32> to vector<1x8x128xf32>
    %cst_37 = arith.constant dense<0.000000e+00> : vector<1xf32>
    %115 = vector.multi_reduction <add>, %114, %cst_37 [1, 2] : vector<1x8x128xf32> to vector<1xf32>
    %116 = vector.shape_cast %115 : vector<1xf32> to vector<1x1x1xf32>
    %117 = vector.extract %116[0, 0, 0] : f32 from vector<1x1x1xf32>
    %cst_38 = arith.constant 0.142857149 : f32
    %118 = arith.mulf %117, %cst_38 : f32
    %cst_39 = arith.constant 9.99999993E-9 : f32
    %119 = arith.addf %118, %cst_39 : f32
    %120 = math.rsqrt %119 : f32
    %121 = vector.broadcast %120 : f32 to vector<8x128xf32>
    %122 = arith.mulf %112, %121 : vector<8x128xf32>
    %123 = vector.broadcast %109 : f32 to vector<8x128xf32>
    %124 = arith.addf %122, %123 : vector<8x128xf32>
    %125 = arith.mulf %31, %124 : vector<8x128xf32>
    %126 = arith.mulf %39, %124 : vector<8x128xf32>
    %127 = arith.minimumf %125, %126 : vector<8x128xf32>
    %128 = arith.mulf %127, %27 : vector<8x128xf32>
    %129 = vector.shape_cast %128 : vector<8x128xf32> to vector<1x8x128xf32>
    %cst_40 = arith.constant dense<0.000000e+00> : vector<1xf32>
    %130 = vector.multi_reduction <add>, %129, %cst_40 [1, 2] : vector<1x8x128xf32> to vector<1xf32>
    %131 = vector.shape_cast %130 : vector<1xf32> to vector<1x1x1xf32>
    %132 = vector.extract %131[0, 0, 0] : f32 from vector<1x1x1xf32>
    %cst_41 = arith.constant 1.250000e-01 : f32
    %133 = arith.mulf %132, %cst_41 : f32
    %cst_42 = arith.constant 0.000000e+00 : f32
    %134 = arith.subf %cst_42, %133 : f32
    %cst_43 = arith.constant 1.250000e-01 : f32
    %135 = arith.mulf %88, %cst_43 : f32
    %cst_44 = arith.constant 1.250000e-01 : f32
    %136 = arith.mulf %92, %cst_44 : f32
    %cst_45 = arith.constant 0.000000e+00 : f32
    %137 = arith.subf %cst_45, %136 : f32
    %cst_46 = arith.constant 1.250000e-01 : f32
    %138 = arith.mulf %96, %cst_46 : f32
    %139 = arith.mulf %2, %135 : f32
    %140 = arith.mulf %3, %137 : f32
    %141 = arith.addf %134, %140 : f32
    %142 = arith.addf %141, %138 : f32
    %143 = arith.addf %142, %139 : f32
    %c0_47 = arith.constant 0 : index
    %144 = memref.load %arg2[%c0_47] : memref<12xf32, #tpu.memory_space<smem>>
    memref.store %134, %arg2[%c0_47] : memref<12xf32, #tpu.memory_space<smem>>
    %c1_48 = arith.constant 1 : index
    %145 = memref.load %arg2[%c1_48] : memref<12xf32, #tpu.memory_space<smem>>
    memref.store %134, %arg2[%c1_48] : memref<12xf32, #tpu.memory_space<smem>>
    %c2_49 = arith.constant 2 : index
    %146 = memref.load %arg2[%c2_49] : memref<12xf32, #tpu.memory_space<smem>>
    memref.store %135, %arg2[%c2_49] : memref<12xf32, #tpu.memory_space<smem>>
    %c3_50 = arith.constant 3 : index
    %147 = memref.load %arg2[%c3_50] : memref<12xf32, #tpu.memory_space<smem>>
    memref.store %139, %arg2[%c3_50] : memref<12xf32, #tpu.memory_space<smem>>
    %c4_51 = arith.constant 4 : index
    %148 = memref.load %arg2[%c4_51] : memref<12xf32, #tpu.memory_space<smem>>
    memref.store %137, %arg2[%c4_51] : memref<12xf32, #tpu.memory_space<smem>>
    %c5_52 = arith.constant 5 : index
    %149 = memref.load %arg2[%c5_52] : memref<12xf32, #tpu.memory_space<smem>>
    memref.store %140, %arg2[%c5_52] : memref<12xf32, #tpu.memory_space<smem>>
    %c6_53 = arith.constant 6 : index
    %150 = memref.load %arg2[%c6_53] : memref<12xf32, #tpu.memory_space<smem>>
    memref.store %138, %arg2[%c6_53] : memref<12xf32, #tpu.memory_space<smem>>
    %c7 = arith.constant 7 : index
    %151 = memref.load %arg2[%c7] : memref<12xf32, #tpu.memory_space<smem>>
    memref.store %143, %arg2[%c7] : memref<12xf32, #tpu.memory_space<smem>>
    %cst_54 = arith.constant 1.250000e-01 : f32
    %152 = arith.mulf %100, %cst_54 : f32
    %c8 = arith.constant 8 : index
    %153 = memref.load %arg2[%c8] : memref<12xf32, #tpu.memory_space<smem>>
    memref.store %152, %arg2[%c8] : memref<12xf32, #tpu.memory_space<smem>>
    %cst_55 = arith.constant 1.250000e-01 : f32
    %154 = arith.mulf %104, %cst_55 : f32
    %c9 = arith.constant 9 : index
    %155 = memref.load %arg2[%c9] : memref<12xf32, #tpu.memory_space<smem>>
    memref.store %154, %arg2[%c9] : memref<12xf32, #tpu.memory_space<smem>>
    %cst_56 = arith.constant 1.250000e-01 : f32
    %156 = arith.mulf %108, %cst_56 : f32
    %c10 = arith.constant 10 : index
    %157 = memref.load %arg2[%c10] : memref<12xf32, #tpu.memory_space<smem>>
    memref.store %156, %arg2[%c10] : memref<12xf32, #tpu.memory_space<smem>>
    %c11 = arith.constant 11 : index
    %158 = memref.load %arg2[%c11] : memref<12xf32, #tpu.memory_space<smem>>
    memref.store %136, %arg2[%c11] : memref<12xf32, #tpu.memory_space<smem>>
    return
  }
}

</mosaic_0001>

<llo_original>
// kernel: tpu_custom_call.1
$region0: #{tpu_custom_call.1}
  #allocation0 [shape = 'u32[]', space=smem, size = 0x4, offset = 0x4, fixed_abs, tag = 'smem constant byte address 0x4 - core index']
  #allocation1 [shape = 'u32[144,128]{1,0:T(1,128)}', space=vmem, size = 0x12000, scoped, tag = 'internal scratch']
  %s0 = inlined_call_operand.hbm [shape: f32[5], index: 0, kind: input, shape index: {}]
  %s1 = inlined_call_operand.hbm [shape: f32[7,8,128], index: 1, kind: input, shape index: {}]
  %s2 = inlined_call_operand.hbm [shape: f32[12], index: 2, kind: output, shape index: {}]
  %s3 = sld [smem:[#allocation0]]
  $region26: #{tpu_custom_call.1} parent=0
    _
  %s5 = ssub.s32 1, %s3
  %s6 = scalar_select 0, %s5, %s3
  $region1: #{tpu_custom_call.1} parent=0
    #allocation2 [shape = 'u8[512]{0}', space=smem, size = 0x200, scoped, tag = 'input window, operand 0, single buffered']
    #allocation3 [shape = 's32[1]{0}', space=sflag, size = 0x4, scoped, tag = 'scoped memory for tpu_custom_call.1']
    #allocation4 [shape = 's32[1]{0}', space=sflag, size = 0x4, scoped, tag = 'scoped memory for tpu_custom_call.1']
    #allocation5 [shape = 's32[1]{0}', space=sflag, size = 0x4, scoped, tag = 'scoped memory for tpu_custom_call.1']
    #allocation6 [shape = 'u8[28672]{0}', space=vmem, size = 0x7000, scoped, tag = 'input window, operand 1, single buffered']
    #allocation7 [shape = 'u8[512]{0}', space=smem, size = 0x200, scoped, tag = 'output window, operand 0, single buffered']
    %7 = vsyncpa [#allocation4], 0
    %8 = vsyncpa [#allocation3], 0
    %9 = vsyncpa [#allocation5], 0
    // Predicated region
    $region2: #{tpu_custom_call.1} parent=1 // pred_check
      _
    $region3: #{tpu_custom_call.1} parent=1 // pred_check_branch
      %11 = sbr.rel (0) target = $region5
    $region4: #{tpu_custom_call.1} parent=1 // pred_region
      %s13 = ssub.s32 16, 16
      %14 = vsyncadd [#allocation4], %s13
      %17 = dma.hbm_to_smem %s0, 16, [#allocation2], [#allocation4]
    $region5: #{tpu_custom_call.1} parent=1 // pred_fallthru
      _
    // Predicated region
    $region6: #{tpu_custom_call.1} parent=1 // pred_check
      _
    $region7: #{tpu_custom_call.1} parent=1 // pred_check_branch
      %19 = sbr.rel (0) target = $region9
    $region8: #{tpu_custom_call.1} parent=1 // pred_region
      %s21 = ssub.s32 896, 896
      %22 = vsyncadd [#allocation3], %s21
      %s23 = sshll.u32 [#allocation6], 4
      %s24 = int_to_ptr.vmem [resolvable:$true] %s23
      %29 = dma.hbm_to_vmem [thread:$0]  %s1, 896, %s24, [#allocation3], 128, 128, 8
    $region9: #{tpu_custom_call.1} parent=1 // pred_fallthru
      _
    // Predicated region
    $region10: #{tpu_custom_call.1} parent=1 // pred_check
      _
    $region11: #{tpu_custom_call.1} parent=1 // pred_check_branch
      %31 = sbr.rel (0) target = $region13
    $region12: #{tpu_custom_call.1} parent=1 // pred_region
      %32 = dma.done [#allocation4], 16
    $region13: #{tpu_custom_call.1} parent=1 // pred_fallthru
      _
    // Predicated region
    $region14: #{tpu_custom_call.1} parent=1 // pred_check
      _
    $region15: #{tpu_custom_call.1} parent=1 // pred_check_branch
      %34 = sbr.rel (0) target = $region17
    $region16: #{tpu_custom_call.1} parent=1 // pred_region
      %35 = dma.done [#allocation3], 896
    $region17: #{tpu_custom_call.1} parent=1 // pred_fallthru
      _
    %36 = sfence
    %s37 = sld [smem:[#allocation2]]
    %s38 = sld [smem:[#allocation2 + $0x1]]
    %s39 = sld [smem:[#allocation2 + $0x2]]
    %s40 = sld [smem:[#allocation2 + $0x3]]
    %s41 = sld [smem:[#allocation2 + $0x4]]
    %v42 = vld [vmem:[#allocation6] sm:$0xff]
    %s43 = scalar_lea.vmem [#allocation6], 8
    %v44 = vld [vmem:[%s43] sm:$0xff]
    %s45 = scalar_lea.vmem [#allocation6], 16
    %v46 = vld [vmem:[%s45] sm:$0xff]
    %s47 = scalar_lea.vmem [#allocation6], 24
    %v48 = vld [vmem:[%s47] sm:$0xff]
    %s49 = scalar_lea.vmem [#allocation6], 32
    %v50 = vld [vmem:[%s49] sm:$0xff]
    %s51 = scalar_lea.vmem [#allocation6], 40
    %v52 = vld [vmem:[%s51] sm:$0xff]
    %s53 = scalar_lea.vmem [#allocation6], 48
    %v54 = vld [vmem:[%s53] sm:$0xff]
    %v55 = vlaneseq
    %v56 = vshrl.u32 %v55, 7
    %v57 = vmul.u32 %v56, 128
    %v58 = vlaneseq
    %v59 = vand.u32 %v58, 127
    %v60 = vadd.s32 %v57, %v59
    %vm61 = vcmp.lt.s32.totalorder %v60, 8
    %v62 = vsel %vm61, 1, 0
    %v63 = vcvt.s32.f32 %v62
    %v64 = vstv %s37
    %v65 = vstv %s38
    %v66 = vsub.f32 %v42, %v44
    %v67 = vmul.f32 %v66, 1.442695
    %v68 = vpow.pop %v67
    %v69 = vsub.f32 %v68, 1.0
    %v70 = vsub.f32 1.0, %v64
    %v71 = vadd.f32 %v64, 1.0
    %v72 = vmax.f32 %v70, %v68
    %v73 = vmin.f32 %v71, %v72
    %v74 = vsub.f32 %v52, %v54
    %v75 = vsub.f32 0.0, %v65
    %v76 = vmax.f32 %v75, %v74
    %v77 = vmin.f32 %v65, %v76
    %v78 = vadd.f32 %v54, %v77
    %v79 = vsub.f32 %v52, %v50
    %v80 = vand.u32 2147483647, %v79
    %vm81 = vcmp.lt.f32.partialorder %v80, 1.0
    %v82 = vmul.f32 %v79, 0.5
    %v83 = vmul.f32 %v82, %v79
    %v84 = vsub.f32 %v80, 0.5
    %v85 = vsel %vm81, %v83, %v84
    %v86 = vsub.f32 %v78, %v50
    %v87 = vand.u32 2147483647, %v86
    %vm88 = vcmp.lt.f32.partialorder %v87, 1.0
    %v89 = vmul.f32 %v86, 0.5
    %v90 = vmul.f32 %v89, %v86
    %v91 = vsub.f32 %v87, 0.5
    %v92 = vsel %vm88, %v90, %v91
    %v93 = vmax.f32 %v85, %v92
    %v94 = vstv %s41
    %v95 = vsub.f32 %v94, %v46
    %v96 = vmax.f32 %v95, 0.0
    %v97 = vmul.f32 %v96, %v63
    %v98 = vsub.f32 %v69, %v66
    %v99 = vand.u32 2147483647, %v69
    %vm100 = vcmp.gt.f32.partialorder %v99, %v64
    %v101 = vsel %vm100, 1, 0
    %v102 = vcvt.s32.f32 %v101
    %v103 = vand.u32 2147483647, %v74
    %vm104 = vcmp.gt.f32.partialorder %v103, %v65
    %v105 = vsel %vm104, 1, 0
    %v106 = vcvt.s32.f32 %v105
    %107 = vadd.xlane.f32.xlu0 %v48
    %v108 = vpop.xlane.xlu0 %107
    %v109 = vrot.slane %v108, 4
    %v110 = vadd.f32 %v108, %v109
    %v111 = vrot.slane %v110, 2
    %v112 = vadd.f32 %v110, %v111
    %v113 = vrot.slane %v112, 1
    %v114 = vadd.f32 %v112, %v113
    %s115 = vtos %v114
    %116 = vadd.xlane.f32.xlu0 %v93
    %v117 = vpop.xlane.xlu0 %116
    %v118 = vrot.slane %v117, 4
    %v119 = vadd.f32 %v117, %v118
    %v120 = vrot.slane %v119, 2
    %v121 = vadd.f32 %v119, %v120
    %v122 = vrot.slane %v121, 1
    %v123 = vadd.f32 %v121, %v122
    %s124 = vtos %v123
    %125 = vadd.xlane.f32.xlu0 %v46
    %v126 = vpop.xlane.xlu0 %125
    %v127 = vrot.slane %v126, 4
    %v128 = vadd.f32 %v126, %v127
    %v129 = vrot.slane %v128, 2
    %v130 = vadd.f32 %v128, %v129
    %v131 = vrot.slane %v130, 1
    %v132 = vadd.f32 %v130, %v131
    %s133 = vtos %v132
    %134 = vadd.xlane.f32.xlu0 %v97
    %v135 = vpop.xlane.xlu0 %134
    %v136 = vrot.slane %v135, 4
    %v137 = vadd.f32 %v135, %v136
    %v138 = vrot.slane %v137, 2
    %v139 = vadd.f32 %v137, %v138
    %v140 = vrot.slane %v139, 1
    %v141 = vadd.f32 %v139, %v140
    %s142 = vtos %v141
    %143 = vadd.xlane.f32.xlu0 %v98
    %v144 = vpop.xlane.xlu0 %143
    %v145 = vrot.slane %v144, 4
    %v146 = vadd.f32 %v144, %v145
    %v147 = vrot.slane %v146, 2
    %v148 = vadd.f32 %v146, %v147
    %v149 = vrot.slane %v148, 1
    %v150 = vadd.f32 %v148, %v149
    %s151 = vtos %v150
    %152 = vadd.xlane.f32.xlu0 %v102
    %v153 = vpop.xlane.xlu0 %152
    %v154 = vrot.slane %v153, 4
    %v155 = vadd.f32 %v153, %v154
    %v156 = vrot.slane %v155, 2
    %v157 = vadd.f32 %v155, %v156
    %v158 = vrot.slane %v157, 1
    %v159 = vadd.f32 %v157, %v158
    %s160 = vtos %v159
    %161 = vadd.xlane.f32.xlu0 %v106
    %v162 = vpop.xlane.xlu0 %161
    %v163 = vrot.slane %v162, 4
    %v164 = vadd.f32 %v162, %v163
    %v165 = vrot.slane %v164, 2
    %v166 = vadd.f32 %v164, %v165
    %v167 = vrot.slane %v166, 1
    %v168 = vadd.f32 %v166, %v167
    %s169 = vtos %v168
    %s170 = smul.f32 %s115, 0.125
    %v171 = vstv %s170
    %v172 = vsub.f32 %v48, %v171
    %v173 = vmul.f32 %v172, %v63
    %v174 = vmul.f32 %v173, %v173
    %175 = vadd.xlane.f32.xlu0 %v174
    %v176 = vpop.xlane.xlu0 %175
    %v177 = vrot.slane %v176, 4
    %v178 = vadd.f32 %v176, %v177
    %v179 = vrot.slane %v178, 2
    %v180 = vadd.f32 %v178, %v179
    %v181 = vrot.slane %v180, 1
    %v182 = vadd.f32 %v180, %v181
    %s183 = vtos %v182
    %s184 = smul.f32 %s183, 0.14285715
    %s185 = sadd.f32 %s184, 1e-08
    %v186 = vstv %s185
    %v187 = vrsqrt.pop %v186
    %s188 = vtos %v187
    %v189 = vstv %s188
    %v190 = vmul.f32 %v173, %v189
    %v191 = vadd.f32 %v190, %v171
    %v192 = vmul.f32 %v68, %v191
    %v193 = vmul.f32 %v73, %v191
    %v194 = vmin.f32 %v192, %v193
    %v195 = vmul.f32 %v194, %v63
    %196 = vadd.xlane.f32.xlu0 %v195
    %v197 = vpop.xlane.xlu0 %196
    %v198 = vrot.slane %v197, 4
    %v199 = vadd.f32 %v197, %v198
    %v200 = vrot.slane %v199, 2
    %v201 = vadd.f32 %v199, %v200
    %v202 = vrot.slane %v201, 1
    %v203 = vadd.f32 %v201, %v202
    %s204 = vtos %v203
    %s205 = smul.f32 %s204, 0.125
    %s206 = ssub.f32 0.0, %s205
    %s207 = smul.f32 %s124, 0.125
    %s208 = smul.f32 %s133, 0.125
    %s209 = ssub.f32 0.0, %s208
    %s210 = smul.f32 %s142, 0.125
    %s211 = smul.f32 %s39, %s207
    %s212 = smul.f32 %s40, %s209
    %s213 = sadd.f32 %s206, %s212
    %s214 = sadd.f32 %s213, %s210
    %s215 = sadd.f32 %s214, %s211
    %s216 = scalar_lea.smem [#allocation7], 0
    %217 = sst [smem:[%s216]] %s206
    %s218 = scalar_lea.smem [#allocation7], 1
    %219 = sst [smem:[%s218]] %s206
    %s220 = scalar_lea.smem [#allocation7], 2
    %221 = sst [smem:[%s220]] %s207
    %s222 = scalar_lea.smem [#allocation7], 3
    %223 = sst [smem:[%s222]] %s211
    %s224 = scalar_lea.smem [#allocation7], 4
    %225 = sst [smem:[%s224]] %s209
    %s226 = scalar_lea.smem [#allocation7], 5
    %227 = sst [smem:[%s226]] %s212
    %s228 = scalar_lea.smem [#allocation7], 6
    %229 = sst [smem:[%s228]] %s210
    %s230 = scalar_lea.smem [#allocation7], 7
    %231 = sst [smem:[%s230]] %s215
    %s232 = smul.f32 %s151, 0.125
    %s233 = scalar_lea.smem [#allocation7], 8
    %234 = sst [smem:[%s233]] %s232
    %s235 = smul.f32 %s160, 0.125
    %s236 = scalar_lea.smem [#allocation7], 9
    %237 = sst [smem:[%s236]] %s235
    %s238 = smul.f32 %s169, 0.125
    %s239 = scalar_lea.smem [#allocation7], 10
    %240 = sst [smem:[%s239]] %s238
    %s241 = scalar_lea.smem [#allocation7], 11
    %242 = sst [smem:[%s241]] %s208
    // Predicated region
    $region18: #{tpu_custom_call.1} parent=1 // pred_check
      _
    $region19: #{tpu_custom_call.1} parent=1 // pred_check_branch
      %244 = sbr.rel (0) target = $region21
    $region20: #{tpu_custom_call.1} parent=1 // pred_region
      %s246 = ssub.s32 16, 16
      %247 = vsyncadd [#allocation5], %s246
      %250 = dma.smem_to_hbm [#allocation7], 16, %s2, [#allocation5]
    $region21: #{tpu_custom_call.1} parent=1 // pred_fallthru
      _
    // Predicated region
    $region22: #{tpu_custom_call.1} parent=1 // pred_check
      _
    $region23: #{tpu_custom_call.1} parent=1 // pred_check_branch
      %252 = sbr.rel (0) target = $region25
    $region24: #{tpu_custom_call.1} parent=1 // pred_region
      %253 = dma.done [#allocation5], 16
    $region25: #{tpu_custom_call.1} parent=1 // pred_fallthru
      _
    %254 = sfence
    %255 = vsyncpa [#allocation3], 1
    %256 = vsyncpa [#allocation4], 1
    %257 = vsyncpa [#allocation5], 1

</llo_original>
